<compile_context>
chip_gen: v7x
topology: tpu7x:2x2x1
jax: 0.10.0
libtpu: 0.0.40
codegen_flags: <defaults>
</compile_context>

<pallas_src>
import math
from functools import partial

import jax
import jax.numpy as jnp
from jax.experimental import pallas as pl
from jax.experimental.pallas import tpu as pltpu

LANE = 128
SUBLANE = 8
MAX_ROWS_PER_BLOCK = 1024  # tile the batch only past this many padded rows


def _round_up(n, m):
    return (n + m - 1) // m * m


def _make_mlp_kernel(num_layers):
    """Kernel over refs: (x, W_all, b_all, out); runs the full MLP chain in VMEM."""

    def kernel(x_ref, w_ref, b_ref, out_ref):
        h = x_ref[...]                                      # (TB, 128) f32
        for li in range(num_layers):                        # static unroll
            w = w_ref[li]                                   # (128, 128) bf16
            b = b_ref[li]                                   # (1, 128)   f32
            h = jnp.dot(h.astype(jnp.bfloat16), w,
                        preferred_element_type=jnp.float32) + b
            if li < num_layers - 1:
                h = jnp.maximum(h, 0.0)                     # ReLU after hidden linears
            else:
                h = jnp.tanh(h)                             # Tanh after final linear
        out_ref[...] = h

    return kernel


def build_dqn_params(key, n_observations, n_actions, shrink=3):
    """Replicates the layer-shape logic of the PyTorch DQN.__init__ and initializes
    parameters deterministically with PyTorch-Linear-style uniform init.
    Returns a list of (W:(din,dout), b:(dout,)) in float32 (W == nn.Linear weight.T)."""
    step = int(n_actions > n_observations) * shrink
    assert step > 0, "reference module requires n_actions > n_observations"

    layer_dims = []
    for n_neurons in range(n_observations, n_actions, step):
        layer_dims.append((n_neurons, n_neurons + step))
    layer_dims.append((layer_dims[-1][1], n_actions))       # final linear (then Tanh)

    params = []
    for din, dout in layer_dims:
        key, kw, kb = jax.random.split(key, 3)
        bound = 1.0 / math.sqrt(din)
        W = jax.random.uniform(kw, (din, dout), jnp.float32, -bound, bound)
        b = jax.random.uniform(kb, (dout,), jnp.float32, -bound, bound)
        params.append((W, b))
    return params


def pack_params(params):
    """One-time padding/packing of all layers:
       W_all: (L, 128, 128) bf16, b_all: (L, 1, 128) f32."""
    L = len(params)
    max_dim = max(max(W.shape) for W, _ in params)
    assert max_dim <= LANE, "this kernel assumes all feature dims fit in one lane tile"

    W_all = jnp.zeros((L, LANE, LANE), jnp.float32)
    b_all = jnp.zeros((L, 1, LANE), jnp.float32)
    for li, (W, b) in enumerate(params):
        din, dout = W.shape
        W_all = W_all.at[li, :din, :dout].set(W)
        b_all = b_all.at[li, 0, :dout].set(b)
    return W_all.astype(jnp.bfloat16), b_all


@partial(jax.jit, static_argnums=(3,))
def dqn_forward(x, W_all, b_all, n_actions):
    """x: (batch, n_observations) -> (batch, n_actions). Fully fused under jit."""
    batch, n_obs = x.shape
    L = W_all.shape[0]

    b_pad = _round_up(max(batch, SUBLANE), SUBLANE)
    if b_pad > MAX_ROWS_PER_BLOCK:
        tb = MAX_ROWS_PER_BLOCK
        b_pad = _round_up(batch, tb)
    else:
        tb = b_pad

    x_pad = jnp.pad(x.astype(jnp.float32),
                    ((0, b_pad - batch), (0, LANE - n_obs)))

    out = pl.pallas_call(
        _make_mlp_kernel(L),
        out_shape=jax.ShapeDtypeStruct((b_pad, LANE), jnp.float32),
        grid_spec=pltpu.PrefetchScalarGridSpec(
            num_scalar_prefetch=0,
            grid=(b_pad // tb,),
            in_specs=[
                pl.BlockSpec((tb, LANE), lambda i: (i, 0)),        # x tile
                pl.BlockSpec((L, LANE, LANE), lambda i: (0, 0, 0)),  # all weights
                pl.BlockSpec((L, 1, LANE), lambda i: (0, 0, 0)),     # all biases
            ],
            out_specs=pl.BlockSpec((tb, LANE), lambda i: (i, 0)),
        ),
        compiler_params=pltpu.CompilerParams(
            dimension_semantics=("parallel",)),   # shards batch across TCs on v7x
    )(x_pad, W_all, b_all)

    return out[:batch, :n_actions]


def dqn_forward_ref_bf16(x, params):
    """Pure-JAX mirror of the kernel math (bf16 operands, f32 accumulate)."""
    h = x.astype(jnp.float32)
    for li, (W, b) in enumerate(params):
        h = jnp.dot(h.astype(jnp.bfloat16), W.astype(jnp.bfloat16),
                    preferred_element_type=jnp.float32) + b
        h = jnp.maximum(h, 0.0) if li < len(params) - 1 else jnp.tanh(h)
    return h


def dqn_forward_ref_f32(x, params):
    """Full-precision reference (mirrors the PyTorch forward)."""
    h = x.astype(jnp.float32)
    for li, (W, b) in enumerate(params):
        h = h @ W + b
        h = jnp.maximum(h, 0.0) if li < len(params) - 1 else jnp.tanh(h)
    return h


if __name__ == "__main__":
    # Small config consistent with the module: needs n_actions > n_observations.
    n_observations, n_actions, shrink = 4, 16, 3
    batch = 2

    key = jax.random.PRNGKey(0)
    key_params, key_x, key_x2 = jax.random.split(key, 3)
    params = build_dqn_params(key_params, n_observations, n_actions, shrink)
    W_all, b_all = pack_params(params)   # packed/padded once, reused every call

    x = jax.random.normal(key_x, (batch, n_observations), dtype=jnp.float32)

    out = dqn_forward(x, W_all, b_all, n_actions)
    out = jax.block_until_ready(out)
    assert out.shape == (batch, n_actions)

    # Exact mirror of the kernel's bf16-operand / f32-accumulate math.
    ref_bf16 = dqn_forward_ref_bf16(x, params)
    assert jnp.allclose(out, ref_bf16, atol=1e-4, rtol=1e-4), "mismatch vs bf16 reference"
    # Sanity check vs full-f32 math (bf16 weights introduce ~0.4% per-layer error).
    ref_f32 = dqn_forward_ref_f32(x, params)
    assert jnp.allclose(out, ref_f32, atol=5e-2, rtol=5e-2), "mismatch vs f32 reference"

    # A slightly larger (replay-style) batch exercises the same cached jit trace shape
    # family and the single-block fast path.
    x2 = jax.random.normal(key_x2, (64, n_observations), dtype=jnp.float32)
    out2 = jax.block_until_ready(dqn_forward(x2, W_all, b_all, n_actions))
    assert out2.shape == (64, n_actions)
    assert jnp.allclose(out2, dqn_forward_ref_bf16(x2, params), atol=1e-4, rtol=1e-4)

    print("KERNEL_OK")
</pallas_src>

<mosaic_0001>
module attributes {stable_mosaic.version = 11 : i64} {
  func.func @kernel(%arg0: i32, %arg1: memref<8x128xf32, #tpu.memory_space<vmem>>, %arg2: memref<5x128x128xbf16, #tpu.memory_space<vmem>>, %arg3: memref<5x1x128xf32, #tpu.memory_space<vmem>>, %arg4: memref<8x128xf32, #tpu.memory_space<vmem>>) attributes {dimension_semantics = [#tpu.dimension_semantics<parallel>], iteration_bounds = array<i64: 1>, scalar_prefetch = 0 : i64, scratch_operands = 0 : i64, tpu.core_type = #tpu.core_type<tc>, window_params = [{transform_indices = @transform_0, window_bounds = array<i64: 8, 128>}, {pipeline_mode = #tpu.pipeline_mode<synchronous>, transform_indices = @transform_1, window_bounds = array<i64: 5, 128, 128>}, {pipeline_mode = #tpu.pipeline_mode<synchronous>, transform_indices = @transform_2, window_bounds = array<i64: 5, 1, 128>}, {transform_indices = @transform_3, window_bounds = array<i64: 8, 128>}]} {
    %c0 = arith.constant 0 : index
    %c0_0 = arith.constant 0 : index
    %0 = vector.load %arg1[%c0, %c0_0] : memref<8x128xf32, #tpu.memory_space<vmem>>, vector<8x128xf32>
    %c0_1 = arith.constant 0 : index
    %c0_2 = arith.constant 0 : index
    %c0_3 = arith.constant 0 : index
    %1 = vector.load %arg2[%c0_1, %c0_2, %c0_3] : memref<5x128x128xbf16, #tpu.memory_space<vmem>>, vector<1x128x128xbf16>
    %2 = vector.shape_cast %1 : vector<1x128x128xbf16> to vector<128x128xbf16>
    %c0_4 = arith.constant 0 : index
    %c0_5 = arith.constant 0 : index
    %c0_6 = arith.constant 0 : index
    %3 = vector.load %arg3[%c0_4, %c0_5, %c0_6] : memref<5x1x128xf32, #tpu.memory_space<vmem>>, vector<1x1x128xf32>
    %4 = vector.shape_cast %3 : vector<1x1x128xf32> to vector<1x128xf32>
    %5 = arith.truncf %0 : vector<8x128xf32> to vector<8x128xbf16>
    %cst = arith.constant dense<0.000000e+00> : vector<8x128xf32>
    %6 = tpu.matmul %5, %2, %cst {dimension_numbers = #tpu.dot_dimension_numbers<[1], [0], [0], [1], [0, 0, 1, 1], [], []>} : vector<8x128xbf16>, vector<128x128xbf16>, vector<8x128xf32> -> vector<8x128xf32>
    %7 = vector.broadcast %4 : vector<1x128xf32> to vector<8x128xf32>
    %8 = arith.addf %6, %7 : vector<8x128xf32>
    %cst_7 = arith.constant 0.000000e+00 : f32
    %9 = vector.broadcast %cst_7 : f32 to vector<8x128xf32>
    %10 = arith.maximumf %8, %9 : vector<8x128xf32>
    %c1 = arith.constant 1 : index
    %c0_8 = arith.constant 0 : index
    %c0_9 = arith.constant 0 : index
    %11 = vector.load %arg2[%c1, %c0_8, %c0_9] : memref<5x128x128xbf16, #tpu.memory_space<vmem>>, vector<1x128x128xbf16>
    %12 = vector.shape_cast %11 : vector<1x128x128xbf16> to vector<128x128xbf16>
    %c1_10 = arith.constant 1 : index
    %c0_11 = arith.constant 0 : index
    %c0_12 = arith.constant 0 : index
    %13 = vector.load %arg3[%c1_10, %c0_11, %c0_12] : memref<5x1x128xf32, #tpu.memory_space<vmem>>, vector<1x1x128xf32>
    %14 = vector.shape_cast %13 : vector<1x1x128xf32> to vector<1x128xf32>
    %15 = arith.truncf %10 : vector<8x128xf32> to vector<8x128xbf16>
    %cst_13 = arith.constant dense<0.000000e+00> : vector<8x128xf32>
    %16 = tpu.matmul %15, %12, %cst_13 {dimension_numbers = #tpu.dot_dimension_numbers<[1], [0], [0], [1], [0, 0, 1, 1], [], []>} : vector<8x128xbf16>, vector<128x128xbf16>, vector<8x128xf32> -> vector<8x128xf32>
    %17 = vector.broadcast %14 : vector<1x128xf32> to vector<8x128xf32>
    %18 = arith.addf %16, %17 : vector<8x128xf32>
    %cst_14 = arith.constant 0.000000e+00 : f32
    %19 = vector.broadcast %cst_14 : f32 to vector<8x128xf32>
    %20 = arith.maximumf %18, %19 : vector<8x128xf32>
    %c2 = arith.constant 2 : index
    %c0_15 = arith.constant 0 : index
    %c0_16 = arith.constant 0 : index
    %21 = vector.load %arg2[%c2, %c0_15, %c0_16] : memref<5x128x128xbf16, #tpu.memory_space<vmem>>, vector<1x128x128xbf16>
    %22 = vector.shape_cast %21 : vector<1x128x128xbf16> to vector<128x128xbf16>
    %c2_17 = arith.constant 2 : index
    %c0_18 = arith.constant 0 : index
    %c0_19 = arith.constant 0 : index
    %23 = vector.load %arg3[%c2_17, %c0_18, %c0_19] : memref<5x1x128xf32, #tpu.memory_space<vmem>>, vector<1x1x128xf32>
    %24 = vector.shape_cast %23 : vector<1x1x128xf32> to vector<1x128xf32>
    %25 = arith.truncf %20 : vector<8x128xf32> to vector<8x128xbf16>
    %cst_20 = arith.constant dense<0.000000e+00> : vector<8x128xf32>
    %26 = tpu.matmul %25, %22, %cst_20 {dimension_numbers = #tpu.dot_dimension_numbers<[1], [0], [0], [1], [0, 0, 1, 1], [], []>} : vector<8x128xbf16>, vector<128x128xbf16>, vector<8x128xf32> -> vector<8x128xf32>
    %27 = vector.broadcast %24 : vector<1x128xf32> to vector<8x128xf32>
    %28 = arith.addf %26, %27 : vector<8x128xf32>
    %cst_21 = arith.constant 0.000000e+00 : f32
    %29 = vector.broadcast %cst_21 : f32 to vector<8x128xf32>
    %30 = arith.maximumf %28, %29 : vector<8x128xf32>
    %c3 = arith.constant 3 : index
    %c0_22 = arith.constant 0 : index
    %c0_23 = arith.constant 0 : index
    %31 = vector.load %arg2[%c3, %c0_22, %c0_23] : memref<5x128x128xbf16, #tpu.memory_space<vmem>>, vector<1x128x128xbf16>
    %32 = vector.shape_cast %31 : vector<1x128x128xbf16> to vector<128x128xbf16>
    %c3_24 = arith.constant 3 : index
    %c0_25 = arith.constant 0 : index
    %c0_26 = arith.constant 0 : index
    %33 = vector.load %arg3[%c3_24, %c0_25, %c0_26] : memref<5x1x128xf32, #tpu.memory_space<vmem>>, vector<1x1x128xf32>
    %34 = vector.shape_cast %33 : vector<1x1x128xf32> to vector<1x128xf32>
    %35 = arith.truncf %30 : vector<8x128xf32> to vector<8x128xbf16>
    %cst_27 = arith.constant dense<0.000000e+00> : vector<8x128xf32>
    %36 = tpu.matmul %35, %32, %cst_27 {dimension_numbers = #tpu.dot_dimension_numbers<[1], [0], [0], [1], [0, 0, 1, 1], [], []>} : vector<8x128xbf16>, vector<128x128xbf16>, vector<8x128xf32> -> vector<8x128xf32>
    %37 = vector.broadcast %34 : vector<1x128xf32> to vector<8x128xf32>
    %38 = arith.addf %36, %37 : vector<8x128xf32>
    %cst_28 = arith.constant 0.000000e+00 : f32
    %39 = vector.broadcast %cst_28 : f32 to vector<8x128xf32>
    %40 = arith.maximumf %38, %39 : vector<8x128xf32>
    %c4 = arith.constant 4 : index
    %c0_29 = arith.constant 0 : index
    %c0_30 = arith.constant 0 : index
    %41 = vector.load %arg2[%c4, %c0_29, %c0_30] : memref<5x128x128xbf16, #tpu.memory_space<vmem>>, vector<1x128x128xbf16>
    %42 = vector.shape_cast %41 : vector<1x128x128xbf16> to vector<128x128xbf16>
    %c4_31 = arith.constant 4 : index
    %c0_32 = arith.constant 0 : index
    %c0_33 = arith.constant 0 : index
    %43 = vector.load %arg3[%c4_31, %c0_32, %c0_33] : memref<5x1x128xf32, #tpu.memory_space<vmem>>, vector<1x1x128xf32>
    %44 = vector.shape_cast %43 : vector<1x1x128xf32> to vector<1x128xf32>
    %45 = arith.truncf %40 : vector<8x128xf32> to vector<8x128xbf16>
    %cst_34 = arith.constant dense<0.000000e+00> : vector<8x128xf32>
    %46 = tpu.matmul %45, %42, %cst_34 {dimension_numbers = #tpu.dot_dimension_numbers<[1], [0], [0], [1], [0, 0, 1, 1], [], []>} : vector<8x128xbf16>, vector<128x128xbf16>, vector<8x128xf32> -> vector<8x128xf32>
    %47 = vector.broadcast %44 : vector<1x128xf32> to vector<8x128xf32>
    %48 = arith.addf %46, %47 : vector<8x128xf32>
    %49 = math.tanh %48 : vector<8x128xf32>
    %c0_35 = arith.constant 0 : index
    %c0_36 = arith.constant 0 : index
    %50 = vector.load %arg4[%c0_35, %c0_36] : memref<8x128xf32, #tpu.memory_space<vmem>>, vector<8x128xf32>
    tpu.vector_store %arg4[%c0_35, %c0_36], %49 {strides = array<i32>} : memref<8x128xf32, #tpu.memory_space<vmem>>, vector<8x128xf32>,
    return
  }
  func.func @transform_0(%arg0: i32) -> (i32, i32) {
    %c0_i32 = arith.constant 0 : i32
    %c0_i32_0 = arith.constant 0 : i32
    return %arg0, %c0_i32 : i32, i32
  }
  func.func @transform_1(%arg0: i32) -> (i32, i32, i32) {
    %c0_i32 = arith.constant 0 : i32
    %c0_i32_0 = arith.constant 0 : i32
    %c0_i32_1 = arith.constant 0 : i32
    %c0_i32_2 = arith.constant 0 : i32
    return %c0_i32, %c0_i32_0, %c0_i32_1 : i32, i32, i32
  }
  func.func @transform_2(%arg0: i32) -> (i32, i32, i32) {
    %c0_i32 = arith.constant 0 : i32
    %c0_i32_0 = arith.constant 0 : i32
    %c0_i32_1 = arith.constant 0 : i32
    %c0_i32_2 = arith.constant 0 : i32
    return %c0_i32, %c0_i32_0, %c0_i32_1 : i32, i32, i32
  }
  func.func @transform_3(%arg0: i32) -> (i32, i32) {
    %c0_i32 = arith.constant 0 : i32
    %c0_i32_0 = arith.constant 0 : i32
    return %arg0, %c0_i32 : i32, i32
  }
}

</mosaic_0001>

<llo_original>
// kernel: dqn_forward.1
$region0: #{dqn_forward.1}
  #allocation0 [shape = 'u32[]', space=smem, size = 0x4, offset = 0x4, fixed_abs, tag = 'smem constant byte address 0x4 - core index']
  #allocation1 [shape = 'u32[144,128]{1,0:T(1,128)}', space=vmem, size = 0x12000, scoped, tag = 'internal scratch']
  %s0 = inlined_call_operand.vmem [shape: f32[8,128], index: 0, kind: input, shape index: {}]
  %s1 = inlined_call_operand.hbm [shape: bf16[5,128,128], index: 1, kind: input, shape index: {}]
  %s2 = inlined_call_operand.vmem [shape: f32[5,1,128], index: 2, kind: input, shape index: {}]
  %s3 = inlined_call_operand.vmem [shape: f32[8,128], index: 3, kind: output, shape index: {}]
  %s4 = sld [smem:[#allocation0]]
  $region26: #{dqn_forward.1} parent=0
    _
  %s6 = ssub.s32 1, %s4
  %s7 = scalar_select 0, %s6, %s4
  $region1: #{dqn_forward.1} parent=0
    #allocation2 [shape = 'u8[163840]{0}', space=vmem, size = 0x28000, scoped, tag = 'input window, operand 1, single buffered']
    #allocation3 [shape = 's32[1]{0}', space=sflag, size = 0x4, scoped, tag = 'scoped memory for dqn_forward.1']
    %8 = vsyncpa [#allocation3], 0
    // Predicated region
    $region2: #{dqn_forward.1} parent=1 // pred_check
      _
    $region3: #{dqn_forward.1} parent=1 // pred_check_branch
      %10 = sbr.rel (0) target = $region5
    $region4: #{dqn_forward.1} parent=1 // pred_region
      _
    $region5: #{dqn_forward.1} parent=1 // pred_fallthru
      _
    // Predicated region
    $region6: #{dqn_forward.1} parent=1 // pred_check
      _
    $region7: #{dqn_forward.1} parent=1 // pred_check_branch
      %12 = sbr.rel (0) target = $region9
    $region8: #{dqn_forward.1} parent=1 // pred_region
      %s14 = ssub.s32 5120, 5120
      %15 = vsyncadd [#allocation3], %s14
      %s16 = sshll.u32 [#allocation2], 4
      %s17 = int_to_ptr.vmem [resolvable:$true] %s16
      %22 = dma.hbm_to_vmem [thread:$0]  %s1, 5120, %s17, [#allocation3], 64, 64, 4
    $region9: #{dqn_forward.1} parent=1 // pred_fallthru
      _
    // Predicated region
    $region10: #{dqn_forward.1} parent=1 // pred_check
      _
    $region11: #{dqn_forward.1} parent=1 // pred_check_branch
      %24 = sbr.rel (0) target = $region13
    $region12: #{dqn_forward.1} parent=1 // pred_region
      _
    $region13: #{dqn_forward.1} parent=1 // pred_fallthru
      _
    // Predicated region
    $region14: #{dqn_forward.1} parent=1 // pred_check
      _
    $region15: #{dqn_forward.1} parent=1 // pred_check_branch
      %26 = sbr.rel (0) target = $region17
    $region16: #{dqn_forward.1} parent=1 // pred_region
      %27 = dma.done [#allocation3], 5120
    $region17: #{dqn_forward.1} parent=1 // pred_fallthru
      _
    %v29 = vld [vmem:[%s0] sm:$0xff]
    %v30 = vld [vmem:[#allocation2] sm:$0xf]
    %v31 = vld [vmem:[#allocation2 + $0x4] sm:$0xf]
    %v32 = vld [vmem:[#allocation2 + $0x8] sm:$0xf]
    %v33 = vld [vmem:[#allocation2 + $0xc] sm:$0xf]
    %v34 = vld [vmem:[#allocation2 + $0x10] sm:$0xf]
    %v35 = vld [vmem:[#allocation2 + $0x14] sm:$0xf]
    %v36 = vld [vmem:[#allocation2 + $0x18] sm:$0xf]
    %v37 = vld [vmem:[#allocation2 + $0x1c] sm:$0xf]
    %v38 = vld [vmem:[#allocation2 + $0x20] sm:$0xf]
    %v39 = vld [vmem:[#allocation2 + $0x24] sm:$0xf]
    %v40 = vld [vmem:[#allocation2 + $0x28] sm:$0xf]
    %v41 = vld [vmem:[#allocation2 + $0x2c] sm:$0xf]
    %v42 = vld [vmem:[#allocation2 + $0x30] sm:$0xf]
    %v43 = vld [vmem:[#allocation2 + $0x34] sm:$0xf]
    %v44 = vld [vmem:[#allocation2 + $0x38] sm:$0xf]
    %v45 = vld [vmem:[#allocation2 + $0x3c] sm:$0xf]
    %v46 = vld [vmem:[%s2] sm:$0x1]
    %v47 = vpack.c.bf16 %v29, %v29
    %v49 = vlaneseq
    %v50 = vshrl.u32 %v49, 7
    %v51 = vsub.s32 0, %v50
    %v52 = vrot.slane %v46, %v51
    %v70 = vunpack.c.l.b16 %v30
    %v71 = vunpack.c.l.b16 %v31
    %v72 = vunpack.c.l.b16 %v32
    %v73 = vunpack.c.l.b16 %v33
    %v74 = vunpack.c.l.b16 %v34
    %v75 = vunpack.c.l.b16 %v35
    %v76 = vunpack.c.l.b16 %v36
    %v77 = vunpack.c.l.b16 %v37
    %v78 = vunpack.c.l.b16 %v38
    %v79 = vunpack.c.l.b16 %v39
    %v80 = vunpack.c.l.b16 %v40
    %v81 = vunpack.c.l.b16 %v41
    %v82 = vunpack.c.l.b16 %v42
    %v83 = vunpack.c.l.b16 %v43
    %v84 = vunpack.c.l.b16 %v44
    %v85 = vunpack.c.l.b16 %v45
    %v86 = vpack.c.b16 %v71, %v70
    %v87 = vpack.c.b16 %v73, %v72
    %v88 = vpack.c.b16 %v75, %v74
    %v89 = vpack.c.b16 %v77, %v76
    %v90 = vpack.c.b16 %v79, %v78
    %v91 = vpack.c.b16 %v81, %v80
    %v92 = vpack.c.b16 %v83, %v82
    %v93 = vpack.c.b16 %v85, %v84
    %102 = vmatprep.subr.bf16.mxu0 0
    %103 = vmatpush1.bf16.msra.mxu0 %v86
    %104 = vmatprep.subr.bf16.mxu0 0
    %105 = vmatpush1.bf16.msra.mxu0 %v87
    %106 = vmatprep.subr.bf16.mxu0 0
    %107 = vmatpush1.bf16.msra.mxu0 %v88
    %108 = vmatprep.subr.bf16.mxu0 0
    %109 = vmatpush1.bf16.msra.mxu0 %v89
    %110 = vmatprep.subr.bf16.mxu0 0
    %111 = vmatpush1.bf16.msra.mxu0 %v90
    %112 = vmatprep.subr.bf16.mxu0 0
    %113 = vmatpush1.bf16.msra.mxu0 %v91
    %114 = vmatprep.subr.bf16.mxu0 0
    %115 = vmatpush1.bf16.msra.mxu0 %v92
    %116 = vmatprep.subr.bf16.mxu0 0
    %117 = vmatpush1.bf16.msra.mxu0 %v93
    %118 = vmatprep.subr.bf16.mxu0 0
    %119 = vmatpush1.bf16.msra.mxu0 0
    %120 = vmatprep.subr.bf16.mxu0 0
    %121 = vmatpush1.bf16.msra.mxu0 0
    %122 = vmatprep.subr.bf16.mxu0 0
    %123 = vmatpush1.bf16.msra.mxu0 0
    %124 = vmatprep.subr.bf16.mxu0 0
    %125 = vmatpush1.bf16.msra.mxu0 0
    %126 = vmatprep.subr.bf16.mxu0 0
    %127 = vmatpush1.bf16.msra.mxu0 0
    %128 = vmatprep.subr.bf16.mxu0 0
    %129 = vmatpush1.bf16.msra.mxu0 0
    %130 = vmatprep.subr.bf16.mxu0 0
    %131 = vmatpush1.bf16.msra.mxu0 0
    %132 = vmatprep.subr.bf16.mxu0 0
    %133 = vmatpush1.bf16.msra.mxu0 0
    %134 = vmatprep.mubr.bf16.mxu0 0
    %135 = vmatmul.mubr.bf16.gmra.mrb[0].mxu0 %v47
    %v136 = vpop.f32.mrb[0].mxu0
    %v137 = vadd.f32 %v52, %v136
    %v138 = vpop.f32.mrb[0].mxu0
    %v139 = vpop.f32.mrb[0].mxu0
    %v140 = vpop.f32.mrb[0].mxu0
    %141 = vdwg.mxu0
    %v142 = vmax.f32 %v137, 0.0
    %s143 = scalar_lea.vmem [#allocation2], 64
    %v144 = vld [vmem:[%s143] sm:$0xf]
    %v145 = vld [vmem:[%s143 + $0x4] sm:$0xf]
    %v146 = vld [vmem:[%s143 + $0x8] sm:$0xf]
    %v147 = vld [vmem:[%s143 + $0xc] sm:$0xf]
    %v148 = vld [vmem:[%s143 + $0x10] sm:$0xf]
    %v149 = vld [vmem:[%s143 + $0x14] sm:$0xf]
    %v150 = vld [vmem:[%s143 + $0x18] sm:$0xf]
    %v151 = vld [vmem:[%s143 + $0x1c] sm:$0xf]
    %v152 = vld [vmem:[%s143 + $0x20] sm:$0xf]
    %v153 = vld [vmem:[%s143 + $0x24] sm:$0xf]
    %v154 = vld [vmem:[%s143 + $0x28] sm:$0xf]
    %v155 = vld [vmem:[%s143 + $0x2c] sm:$0xf]
    %v156 = vld [vmem:[%s143 + $0x30] sm:$0xf]
    %v157 = vld [vmem:[%s143 + $0x34] sm:$0xf]
    %v158 = vld [vmem:[%s143 + $0x38] sm:$0xf]
    %v159 = vld [vmem:[%s143 + $0x3c] sm:$0xf]
    %s160 = scalar_lea.vmem %s2, 1
    %v161 = vld [vmem:[%s160] sm:$0x1]
    %v162 = vpack.c.bf16 %v142, %v142
    %v164 = vlaneseq
    %v165 = vshrl.u32 %v164, 7
    %v166 = vsub.s32 0, %v165
    %v167 = vrot.slane %v161, %v166
    %v185 = vunpack.c.l.b16 %v144
    %v186 = vunpack.c.l.b16 %v145
    %v187 = vunpack.c.l.b16 %v146
    %v188 = vunpack.c.l.b16 %v147
    %v189 = vunpack.c.l.b16 %v148
    %v190 = vunpack.c.l.b16 %v149
    %v191 = vunpack.c.l.b16 %v150
    %v192 = vunpack.c.l.b16 %v151
    %v193 = vunpack.c.l.b16 %v152
    %v194 = vunpack.c.l.b16 %v153
    %v195 = vunpack.c.l.b16 %v154
    %v196 = vunpack.c.l.b16 %v155
    %v197 = vunpack.c.l.b16 %v156
    %v198 = vunpack.c.l.b16 %v157
    %v199 = vunpack.c.l.b16 %v158
    %v200 = vunpack.c.l.b16 %v159
    %v201 = vpack.c.b16 %v186, %v185
    %v202 = vpack.c.b16 %v188, %v187
    %v203 = vpack.c.b16 %v190, %v189
    %v204 = vpack.c.b16 %v192, %v191
    %v205 = vpack.c.b16 %v194, %v193
    %v206 = vpack.c.b16 %v196, %v195
    %v207 = vpack.c.b16 %v198, %v197
    %v208 = vpack.c.b16 %v200, %v199
    %217 = vmatprep.subr.bf16.mxu0 0
    %218 = vmatpush1.bf16.msra.mxu0 %v201
    %219 = vmatprep.subr.bf16.mxu0 0
    %220 = vmatpush1.bf16.msra.mxu0 %v202
    %221 = vmatprep.subr.bf16.mxu0 0
    %222 = vmatpush1.bf16.msra.mxu0 %v203
    %223 = vmatprep.subr.bf16.mxu0 0
    %224 = vmatpush1.bf16.msra.mxu0 %v204
    %225 = vmatprep.subr.bf16.mxu0 0
    %226 = vmatpush1.bf16.msra.mxu0 %v205
    %227 = vmatprep.subr.bf16.mxu0 0
    %228 = vmatpush1.bf16.msra.mxu0 %v206
    %229 = vmatprep.subr.bf16.mxu0 0
    %230 = vmatpush1.bf16.msra.mxu0 %v207
    %231 = vmatprep.subr.bf16.mxu0 0
    %232 = vmatpush1.bf16.msra.mxu0 %v208
    %233 = vmatprep.subr.bf16.mxu0 0
    %234 = vmatpush1.bf16.msra.mxu0 0
    %235 = vmatprep.subr.bf16.mxu0 0
    %236 = vmatpush1.bf16.msra.mxu0 0
    %237 = vmatprep.subr.bf16.mxu0 0
    %238 = vmatpush1.bf16.msra.mxu0 0
    %239 = vmatprep.subr.bf16.mxu0 0
    %240 = vmatpush1.bf16.msra.mxu0 0
    %241 = vmatprep.subr.bf16.mxu0 0
    %242 = vmatpush1.bf16.msra.mxu0 0
    %243 = vmatprep.subr.bf16.mxu0 0
    %244 = vmatpush1.bf16.msra.mxu0 0
    %245 = vmatprep.subr.bf16.mxu0 0
    %246 = vmatpush1.bf16.msra.mxu0 0
    %247 = vmatprep.subr.bf16.mxu0 0
    %248 = vmatpush1.bf16.msra.mxu0 0
    %249 = vmatprep.mubr.bf16.mxu0 0
    %250 = vmatmul.mubr.bf16.gmra.mrb[0].mxu0 %v162
    %v251 = vpop.f32.mrb[0].mxu0
    %v252 = vadd.f32 %v167, %v251
    %v253 = vpop.f32.mrb[0].mxu0
    %v254 = vpop.f32.mrb[0].mxu0
    %v255 = vpop.f32.mrb[0].mxu0
    %256 = vdwg.mxu0
    %v257 = vmax.f32 %v252, 0.0
    %s258 = scalar_lea.vmem [#allocation2], 128
    %v259 = vld [vmem:[%s258] sm:$0xf]
    %v260 = vld [vmem:[%s258 + $0x4] sm:$0xf]
    %v261 = vld [vmem:[%s258 + $0x8] sm:$0xf]
    %v262 = vld [vmem:[%s258 + $0xc] sm:$0xf]
    %v263 = vld [vmem:[%s258 + $0x10] sm:$0xf]
    %v264 = vld [vmem:[%s258 + $0x14] sm:$0xf]
    %v265 = vld [vmem:[%s258 + $0x18] sm:$0xf]
    %v266 = vld [vmem:[%s258 + $0x1c] sm:$0xf]
    %v267 = vld [vmem:[%s258 + $0x20] sm:$0xf]
    %v268 = vld [vmem:[%s258 + $0x24] sm:$0xf]
    %v269 = vld [vmem:[%s258 + $0x28] sm:$0xf]
    %v270 = vld [vmem:[%s258 + $0x2c] sm:$0xf]
    %v271 = vld [vmem:[%s258 + $0x30] sm:$0xf]
    %v272 = vld [vmem:[%s258 + $0x34] sm:$0xf]
    %v273 = vld [vmem:[%s258 + $0x38] sm:$0xf]
    %v274 = vld [vmem:[%s258 + $0x3c] sm:$0xf]
    %s275 = scalar_lea.vmem %s2, 2
    %v276 = vld [vmem:[%s275] sm:$0x1]
    %v277 = vpack.c.bf16 %v257, %v257
    %v279 = vlaneseq
    %v280 = vshrl.u32 %v279, 7
    %v281 = vsub.s32 0, %v280
    %v282 = vrot.slane %v276, %v281
    %v300 = vunpack.c.l.b16 %v259
    %v301 = vunpack.c.l.b16 %v260
    %v302 = vunpack.c.l.b16 %v261
    %v303 = vunpack.c.l.b16 %v262
    %v304 = vunpack.c.l.b16 %v263
    %v305 = vunpack.c.l.b16 %v264
    %v306 = vunpack.c.l.b16 %v265
    %v307 = vunpack.c.l.b16 %v266
    %v308 = vunpack.c.l.b16 %v267
    %v309 = vunpack.c.l.b16 %v268
    %v310 = vunpack.c.l.b16 %v269
    %v311 = vunpack.c.l.b16 %v270
    %v312 = vunpack.c.l.b16 %v271
    %v313 = vunpack.c.l.b16 %v272
    %v314 = vunpack.c.l.b16 %v273
    %v315 = vunpack.c.l.b16 %v274
    %v316 = vpack.c.b16 %v301, %v300
    %v317 = vpack.c.b16 %v303, %v302
    %v318 = vpack.c.b16 %v305, %v304
    %v319 = vpack.c.b16 %v307, %v306
    %v320 = vpack.c.b16 %v309, %v308
    %v321 = vpack.c.b16 %v311, %v310
    %v322 = vpack.c.b16 %v313, %v312
    %v323 = vpack.c.b16 %v315, %v314
    %332 = vmatprep.subr.bf16.mxu0 0
    %333 = vmatpush1.bf16.msra.mxu0 %v316
    %334 = vmatprep.subr.bf16.mxu0 0
    %335 = vmatpush1.bf16.msra.mxu0 %v317
    %336 = vmatprep.subr.bf16.mxu0 0
    %337 = vmatpush1.bf16.msra.mxu0 %v318
    %338 = vmatprep.subr.bf16.mxu0 0
    %339 = vmatpush1.bf16.msra.mxu0 %v319
    %340 = vmatprep.subr.bf16.mxu0 0
    %341 = vmatpush1.bf16.msra.mxu0 %v320
    %342 = vmatprep.subr.bf16.mxu0 0
    %343 = vmatpush1.bf16.msra.mxu0 %v321
    %344 = vmatprep.subr.bf16.mxu0 0
    %345 = vmatpush1.bf16.msra.mxu0 %v322
    %346 = vmatprep.subr.bf16.mxu0 0
    %347 = vmatpush1.bf16.msra.mxu0 %v323
    %348 = vmatprep.subr.bf16.mxu0 0
    %349 = vmatpush1.bf16.msra.mxu0 0
    %350 = vmatprep.subr.bf16.mxu0 0
    %351 = vmatpush1.bf16.msra.mxu0 0
    %352 = vmatprep.subr.bf16.mxu0 0
    %353 = vmatpush1.bf16.msra.mxu0 0
    %354 = vmatprep.subr.bf16.mxu0 0
    %355 = vmatpush1.bf16.msra.mxu0 0
    %356 = vmatprep.subr.bf16.mxu0 0
    %357 = vmatpush1.bf16.msra.mxu0 0
    %358 = vmatprep.subr.bf16.mxu0 0
    %359 = vmatpush1.bf16.msra.mxu0 0
    %360 = vmatprep.subr.bf16.mxu0 0
    %361 = vmatpush1.bf16.msra.mxu0 0
    %362 = vmatprep.subr.bf16.mxu0 0
    %363 = vmatpush1.bf16.msra.mxu0 0
    %364 = vmatprep.mubr.bf16.mxu0 0
    %365 = vmatmul.mubr.bf16.gmra.mrb[0].mxu0 %v277
    %v366 = vpop.f32.mrb[0].mxu0
    %v367 = vadd.f32 %v282, %v366
    %v368 = vpop.f32.mrb[0].mxu0
    %v369 = vpop.f32.mrb[0].mxu0
    %v370 = vpop.f32.mrb[0].mxu0
    %371 = vdwg.mxu0
    %v372 = vmax.f32 %v367, 0.0
    %s373 = scalar_lea.vmem [#allocation2], 192
    %v374 = vld [vmem:[%s373] sm:$0xf]
    %v375 = vld [vmem:[%s373 + $0x4] sm:$0xf]
    %v376 = vld [vmem:[%s373 + $0x8] sm:$0xf]
    %v377 = vld [vmem:[%s373 + $0xc] sm:$0xf]
    %v378 = vld [vmem:[%s373 + $0x10] sm:$0xf]
    %v379 = vld [vmem:[%s373 + $0x14] sm:$0xf]
    %v380 = vld [vmem:[%s373 + $0x18] sm:$0xf]
    %v381 = vld [vmem:[%s373 + $0x1c] sm:$0xf]
    %v382 = vld [vmem:[%s373 + $0x20] sm:$0xf]
    %v383 = vld [vmem:[%s373 + $0x24] sm:$0xf]
    %v384 = vld [vmem:[%s373 + $0x28] sm:$0xf]
    %v385 = vld [vmem:[%s373 + $0x2c] sm:$0xf]
    %v386 = vld [vmem:[%s373 + $0x30] sm:$0xf]
    %v387 = vld [vmem:[%s373 + $0x34] sm:$0xf]
    %v388 = vld [vmem:[%s373 + $0x38] sm:$0xf]
    %v389 = vld [vmem:[%s373 + $0x3c] sm:$0xf]
    %s390 = scalar_lea.vmem %s2, 3
    %v391 = vld [vmem:[%s390] sm:$0x1]
    %v392 = vpack.c.bf16 %v372, %v372
    %v394 = vlaneseq
    %v395 = vshrl.u32 %v394, 7
    %v396 = vsub.s32 0, %v395
    %v397 = vrot.slane %v391, %v396
    %v415 = vunpack.c.l.b16 %v374
    %v416 = vunpack.c.l.b16 %v375
    %v417 = vunpack.c.l.b16 %v376
    %v418 = vunpack.c.l.b16 %v377
    %v419 = vunpack.c.l.b16 %v378
    %v420 = vunpack.c.l.b16 %v379
    %v421 = vunpack.c.l.b16 %v380
    %v422 = vunpack.c.l.b16 %v381
    %v423 = vunpack.c.l.b16 %v382
    %v424 = vunpack.c.l.b16 %v383
    %v425 = vunpack.c.l.b16 %v384
    %v426 = vunpack.c.l.b16 %v385
    %v427 = vunpack.c.l.b16 %v386
    %v428 = vunpack.c.l.b16 %v387
    %v429 = vunpack.c.l.b16 %v388
    %v430 = vunpack.c.l.b16 %v389
    %v431 = vpack.c.b16 %v416, %v415
    %v432 = vpack.c.b16 %v418, %v417
    %v433 = vpack.c.b16 %v420, %v419
    %v434 = vpack.c.b16 %v422, %v421
    %v435 = vpack.c.b16 %v424, %v423
    %v436 = vpack.c.b16 %v426, %v425
    %v437 = vpack.c.b16 %v428, %v427
    %v438 = vpack.c.b16 %v430, %v429
    %447 = vmatprep.subr.bf16.mxu0 0
    %448 = vmatpush1.bf16.msra.mxu0 %v431
    %449 = vmatprep.subr.bf16.mxu0 0
    %450 = vmatpush1.bf16.msra.mxu0 %v432
    %451 = vmatprep.subr.bf16.mxu0 0
    %452 = vmatpush1.bf16.msra.mxu0 %v433
    %453 = vmatprep.subr.bf16.mxu0 0
    %454 = vmatpush1.bf16.msra.mxu0 %v434
    %455 = vmatprep.subr.bf16.mxu0 0
    %456 = vmatpush1.bf16.msra.mxu0 %v435
    %457 = vmatprep.subr.bf16.mxu0 0
    %458 = vmatpush1.bf16.msra.mxu0 %v436
    %459 = vmatprep.subr.bf16.mxu0 0
    %460 = vmatpush1.bf16.msra.mxu0 %v437
    %461 = vmatprep.subr.bf16.mxu0 0
    %462 = vmatpush1.bf16.msra.mxu0 %v438
    %463 = vmatprep.subr.bf16.mxu0 0
    %464 = vmatpush1.bf16.msra.mxu0 0
    %465 = vmatprep.subr.bf16.mxu0 0
    %466 = vmatpush1.bf16.msra.mxu0 0
    %467 = vmatprep.subr.bf16.mxu0 0
    %468 = vmatpush1.bf16.msra.mxu0 0
    %469 = vmatprep.subr.bf16.mxu0 0
    %470 = vmatpush1.bf16.msra.mxu0 0
    %471 = vmatprep.subr.bf16.mxu0 0
    %472 = vmatpush1.bf16.msra.mxu0 0
    %473 = vmatprep.subr.bf16.mxu0 0
    %474 = vmatpush1.bf16.msra.mxu0 0
    %475 = vmatprep.subr.bf16.mxu0 0
    %476 = vmatpush1.bf16.msra.mxu0 0
    %477 = vmatprep.subr.bf16.mxu0 0
    %478 = vmatpush1.bf16.msra.mxu0 0
    %479 = vmatprep.mubr.bf16.mxu0 0
    %480 = vmatmul.mubr.bf16.gmra.mrb[0].mxu0 %v392
    %v481 = vpop.f32.mrb[0].mxu0
    %v482 = vadd.f32 %v397, %v481
    %v483 = vpop.f32.mrb[0].mxu0
    %v484 = vpop.f32.mrb[0].mxu0
    %v485 = vpop.f32.mrb[0].mxu0
    %486 = vdwg.mxu0
    %v487 = vmax.f32 %v482, 0.0
    %s488 = scalar_lea.vmem [#allocation2], 256
    %v489 = vld [vmem:[%s488] sm:$0xf]
    %v490 = vld [vmem:[%s488 + $0x4] sm:$0xf]
    %v491 = vld [vmem:[%s488 + $0x8] sm:$0xf]
    %v492 = vld [vmem:[%s488 + $0xc] sm:$0xf]
    %v493 = vld [vmem:[%s488 + $0x10] sm:$0xf]
    %v494 = vld [vmem:[%s488 + $0x14] sm:$0xf]
    %v495 = vld [vmem:[%s488 + $0x18] sm:$0xf]
    %v496 = vld [vmem:[%s488 + $0x1c] sm:$0xf]
    %v497 = vld [vmem:[%s488 + $0x20] sm:$0xf]
    %v498 = vld [vmem:[%s488 + $0x24] sm:$0xf]
    %v499 = vld [vmem:[%s488 + $0x28] sm:$0xf]
    %v500 = vld [vmem:[%s488 + $0x2c] sm:$0xf]
    %v501 = vld [vmem:[%s488 + $0x30] sm:$0xf]
    %v502 = vld [vmem:[%s488 + $0x34] sm:$0xf]
    %v503 = vld [vmem:[%s488 + $0x38] sm:$0xf]
    %v504 = vld [vmem:[%s488 + $0x3c] sm:$0xf]
    %s505 = scalar_lea.vmem %s2, 4
    %v506 = vld [vmem:[%s505] sm:$0x1]
    %v507 = vpack.c.bf16 %v487, %v487
    %v509 = vlaneseq
    %v510 = vshrl.u32 %v509, 7
    %v511 = vsub.s32 0, %v510
    %v512 = vrot.slane %v506, %v511
    %v530 = vunpack.c.l.b16 %v489
    %v531 = vunpack.c.l.b16 %v490
    %v532 = vunpack.c.l.b16 %v491
    %v533 = vunpack.c.l.b16 %v492
    %v534 = vunpack.c.l.b16 %v493
    %v535 = vunpack.c.l.b16 %v494
    %v536 = vunpack.c.l.b16 %v495
    %v537 = vunpack.c.l.b16 %v496
    %v538 = vunpack.c.l.b16 %v497
    %v539 = vunpack.c.l.b16 %v498
    %v540 = vunpack.c.l.b16 %v499
    %v541 = vunpack.c.l.b16 %v500
    %v542 = vunpack.c.l.b16 %v501
    %v543 = vunpack.c.l.b16 %v502
    %v544 = vunpack.c.l.b16 %v503
    %v545 = vunpack.c.l.b16 %v504
    %v546 = vpack.c.b16 %v531, %v530
    %v547 = vpack.c.b16 %v533, %v532
    %v548 = vpack.c.b16 %v535, %v534
    %v549 = vpack.c.b16 %v537, %v536
    %v550 = vpack.c.b16 %v539, %v538
    %v551 = vpack.c.b16 %v541, %v540
    %v552 = vpack.c.b16 %v543, %v542
    %v553 = vpack.c.b16 %v545, %v544
    %562 = vmatprep.subr.bf16.mxu0 0
    %563 = vmatpush1.bf16.msra.mxu0 %v546
    %564 = vmatprep.subr.bf16.mxu0 0
    %565 = vmatpush1.bf16.msra.mxu0 %v547
    %566 = vmatprep.subr.bf16.mxu0 0
    %567 = vmatpush1.bf16.msra.mxu0 %v548
    %568 = vmatprep.subr.bf16.mxu0 0
    %569 = vmatpush1.bf16.msra.mxu0 %v549
    %570 = vmatprep.subr.bf16.mxu0 0
    %571 = vmatpush1.bf16.msra.mxu0 %v550
    %572 = vmatprep.subr.bf16.mxu0 0
    %573 = vmatpush1.bf16.msra.mxu0 %v551
    %574 = vmatprep.subr.bf16.mxu0 0
    %575 = vmatpush1.bf16.msra.mxu0 %v552
    %576 = vmatprep.subr.bf16.mxu0 0
    %577 = vmatpush1.bf16.msra.mxu0 %v553
    %578 = vmatprep.subr.bf16.mxu0 0
    %579 = vmatpush1.bf16.msra.mxu0 0
    %580 = vmatprep.subr.bf16.mxu0 0
    %581 = vmatpush1.bf16.msra.mxu0 0
    %582 = vmatprep.subr.bf16.mxu0 0
    %583 = vmatpush1.bf16.msra.mxu0 0
    %584 = vmatprep.subr.bf16.mxu0 0
    %585 = vmatpush1.bf16.msra.mxu0 0
    %586 = vmatprep.subr.bf16.mxu0 0
    %587 = vmatpush1.bf16.msra.mxu0 0
    %588 = vmatprep.subr.bf16.mxu0 0
    %589 = vmatpush1.bf16.msra.mxu0 0
    %590 = vmatprep.subr.bf16.mxu0 0
    %591 = vmatpush1.bf16.msra.mxu0 0
    %592 = vmatprep.subr.bf16.mxu0 0
    %593 = vmatpush1.bf16.msra.mxu0 0
    %594 = vmatprep.mubr.bf16.mxu0 0
    %595 = vmatmul.mubr.bf16.gmra.mrb[0].mxu0 %v507
    %v596 = vpop.f32.mrb[0].mxu0
    %v597 = vadd.f32 %v512, %v596
    %v598 = vpop.f32.mrb[0].mxu0
    %v599 = vpop.f32.mrb[0].mxu0
    %v600 = vpop.f32.mrb[0].mxu0
    %601 = vdwg.mxu0
    %v602 = vtanh.pop %v597
    %603 = vst [vmem:[%s3] sm:$0xff] %v602
    // Predicated region
    $region18: #{dqn_forward.1} parent=1 // pred_check
      _
    $region19: #{dqn_forward.1} parent=1 // pred_check_branch
      %605 = sbr.rel (0) target = $region21
    $region20: #{dqn_forward.1} parent=1 // pred_region
      _
    $region21: #{dqn_forward.1} parent=1 // pred_fallthru
      _
    // Predicated region
    $region22: #{dqn_forward.1} parent=1 // pred_check
      _
    $region23: #{dqn_forward.1} parent=1 // pred_check_branch
      %607 = sbr.rel (0) target = $region25
    $region24: #{dqn_forward.1} parent=1 // pred_region
      _
    $region25: #{dqn_forward.1} parent=1 // pred_fallthru
      _
    %608 = vsyncpa [#allocation3], 1

</llo_original>
